<compile_context>
chip_gen: v6e
topology: v6e:2x2x1
jax: 0.10.0
libtpu: 0.0.40
codegen_flags: <defaults>
</compile_context>

<pallas_src>
import jax
import jax.numpy as jnp
from jax import lax
from jax.experimental import pallas as pl
from jax.experimental.pallas import tpu as pltpu

EMBED_DIM = 768
PROJ_DIM = 256
LN_EPS = 1e-5


def _head_kernel(x_ref, w1_ref, b1_ref, w2_ref, b2_ref, gamma_ref, beta_ref, o_ref):
    # x_ref: (TB, 768) in storage dtype; w1: (768, 256); w2: (256, 256) in MXU dtype.
    # biases / gamma / beta: (1, 256) f32.

    # projection = Linear(768, 256). Cast the x tile to the weight (MXU) dtype in VMEM
    # (cheap VPU op, no extra HBM pass); accumulate in f32 on the MXU.
    x_tile = x_ref[...].astype(w1_ref.dtype)
    projected = jnp.dot(x_tile, w1_ref[...], preferred_element_type=jnp.float32)
    projected = projected + b1_ref[...]

    # Exact (erf-based) GELU in f32 — matches PyTorch nn.GELU() default.
    # TODO(synk): tanh-approx GELU would move this work from VALU to the (idle) EUP,
    # but deviates ~1e-3 from PyTorch's exact GELU, so it is not swapped in silently.
    inv_sqrt2 = jnp.float32(0.7071067811865476)
    h = 0.5 * projected * (1.0 + lax.erf(projected * inv_sqrt2))

    # fc = Linear(256, 256); feed the MXU in the weight dtype, accumulate in f32.
    y = jnp.dot(h.astype(w2_ref.dtype), w2_ref[...], preferred_element_type=jnp.float32)
    y = y + b2_ref[...]

    # dropout: eval-mode identity (p=0.2 only active in training); residual add.
    y = y + projected

    # LayerNorm over last dim (biased variance, matches nn.LayerNorm).
    mean = jnp.mean(y, axis=-1, keepdims=True)
    var = jnp.mean((y - mean) ** 2, axis=-1, keepdims=True)
    y = (y - mean) * lax.rsqrt(var + LN_EPS)
    y = y * gamma_ref[...] + beta_ref[...]

    o_ref[...] = y.astype(o_ref.dtype)


def text_projection_head(x, w1, b1, w2, b2, gamma, beta, *,
                         block_b=512, matmul_dtype=jnp.bfloat16):
    """Fused projection head. matmul_dtype=None keeps a pure-f32 MXU path."""
    B, E = x.shape
    assert E == EMBED_DIM
    out_dtype = x.dtype

    # Effective batch tile: multiple of 8 (sublane), no bigger than the (padded) batch.
    padded_min = ((B + 7) // 8) * 8
    tb = max(8, (min(block_b, padded_min) // 8) * 8)
    grid_b = pl.cdiv(B, tb)
    # Prefer >=2 grid steps so v7x's two TensorCores can both take grid iterations.
    if grid_b == 1 and tb >= 256:
        tb = ((tb // 2 + 7) // 8) * 8
        grid_b = pl.cdiv(B, tb)
    B_pad = grid_b * tb

    # Weights: cast once in the wrapper (tiny, resident in VMEM). x stays in its
    # storage dtype — the kernel casts each tile on-chip.
    if matmul_dtype is not None:
        w1 = w1.astype(matmul_dtype)
        w2 = w2.astype(matmul_dtype)

    x_in = x
    if B_pad != B:
        x_in = jnp.pad(x_in, ((0, B_pad - B), (0, 0)))

    b1_2d = b1.reshape(1, PROJ_DIM).astype(jnp.float32)
    b2_2d = b2.reshape(1, PROJ_DIM).astype(jnp.float32)
    gamma_2d = gamma.reshape(1, PROJ_DIM).astype(jnp.float32)
    beta_2d = beta.reshape(1, PROJ_DIM).astype(jnp.float32)

    out = pl.pallas_call(
        _head_kernel,
        out_shape=jax.ShapeDtypeStruct((B_pad, PROJ_DIM), out_dtype),
        grid_spec=pltpu.PrefetchScalarGridSpec(
            num_scalar_prefetch=0,
            grid=(grid_b,),
            in_specs=[
                pl.BlockSpec((tb, EMBED_DIM), lambda i: (i, 0)),        # x tile
                pl.BlockSpec((EMBED_DIM, PROJ_DIM), lambda i: (0, 0)),  # w1 (resident)
                pl.BlockSpec((1, PROJ_DIM), lambda i: (0, 0)),          # b1
                pl.BlockSpec((PROJ_DIM, PROJ_DIM), lambda i: (0, 0)),   # w2 (resident)
                pl.BlockSpec((1, PROJ_DIM), lambda i: (0, 0)),          # b2
                pl.BlockSpec((1, PROJ_DIM), lambda i: (0, 0)),          # gamma
                pl.BlockSpec((1, PROJ_DIM), lambda i: (0, 0)),          # beta
            ],
            out_specs=pl.BlockSpec((tb, PROJ_DIM), lambda i: (i, 0)),
        ),
        compiler_params=pltpu.CompilerParams(
            dimension_semantics=("parallel",),
        ),
    )(x_in, w1, b1_2d, w2, b2_2d, gamma_2d, beta_2d)

    return out[:B] if B_pad != B else out


def _reference(x, w1, b1, w2, b2, gamma, beta):
    projected = x.astype(jnp.float32) @ w1.astype(jnp.float32) + b1
    h = jax.nn.gelu(projected, approximate=False)
    y = h @ w2.astype(jnp.float32) + b2
    y = y + projected
    mean = jnp.mean(y, axis=-1, keepdims=True)
    var = jnp.mean((y - mean) ** 2, axis=-1, keepdims=True)
    y = (y - mean) / jnp.sqrt(var + LN_EPS)
    return y * gamma + beta


if __name__ == "__main__":
    key = jax.random.PRNGKey(0)
    kx, kw1, kb1, kw2, kb2, kx2 = jax.random.split(key, 6)

    # Small shapes consistent with the module (embedding/projection dims are fixed).
    B = 8
    x = jax.random.normal(kx, (B, EMBED_DIM), dtype=jnp.float32)

    # Deterministic parameter init (PyTorch Linear-style uniform bounds).
    lim1 = 1.0 / jnp.sqrt(jnp.float32(EMBED_DIM))
    w1 = jax.random.uniform(kw1, (EMBED_DIM, PROJ_DIM), jnp.float32, -lim1, lim1)
    b1 = jax.random.uniform(kb1, (PROJ_DIM,), jnp.float32, -lim1, lim1)
    lim2 = 1.0 / jnp.sqrt(jnp.float32(PROJ_DIM))
    w2 = jax.random.uniform(kw2, (PROJ_DIM, PROJ_DIM), jnp.float32, -lim2, lim2)
    b2 = jax.random.uniform(kb2, (PROJ_DIM,), jnp.float32, -lim2, lim2)
    gamma = jnp.ones((PROJ_DIM,), jnp.float32)
    beta = jnp.zeros((PROJ_DIM,), jnp.float32)

    ref = _reference(x, w1, b1, w2, b2, gamma, beta)

    # 1) exact f32 path — bit-faithful to the PyTorch module.
    out_f32 = jax.block_until_ready(
        text_projection_head(x, w1, b1, w2, b2, gamma, beta, matmul_dtype=None))
    assert out_f32.shape == (B, PROJ_DIM)
    assert jnp.allclose(out_f32, ref, atol=1e-4, rtol=1e-4), "f32 path mismatch vs. reference"

    # 2) default fast path (bf16 MXU weights + in-kernel x cast, f32 accumulate/elementwise).
    out_bf16 = jax.block_until_ready(
        text_projection_head(x, w1, b1, w2, b2, gamma, beta))
    assert out_bf16.shape == (B, PROJ_DIM)
    assert jnp.allclose(out_bf16, ref, atol=5e-2, rtol=5e-2), "bf16 path mismatch vs. reference"

    # 3) ragged batch (exercises cdiv grid + zero-pad + output slice).
    B2 = 10
    x2 = jax.random.normal(kx2, (B2, EMBED_DIM), dtype=jnp.float32)
    ref2 = _reference(x2, w1, b1, w2, b2, gamma, beta)
    out2 = jax.block_until_ready(
        text_projection_head(x2, w1, b1, w2, b2, gamma, beta, matmul_dtype=None))
    assert out2.shape == (B2, PROJ_DIM)
    assert jnp.allclose(out2, ref2, atol=1e-4, rtol=1e-4), "padded-batch path mismatch"

    print("KERNEL_OK")
</pallas_src>

<mosaic_0001>
module attributes {stable_mosaic.version = 11 : i64} {
  func.func @_head_kernel(%arg0: i32, %arg1: memref<8x768xf32, #tpu.memory_space<vmem>>, %arg2: memref<768x256xf32, #tpu.memory_space<vmem>>, %arg3: memref<1x256xf32, #tpu.memory_space<vmem>>, %arg4: memref<256x256xf32, #tpu.memory_space<vmem>>, %arg5: memref<1x256xf32, #tpu.memory_space<vmem>>, %arg6: memref<1x256xf32, #tpu.memory_space<vmem>>, %arg7: memref<1x256xf32, #tpu.memory_space<vmem>>, %arg8: memref<8x256xf32, #tpu.memory_space<vmem>>) attributes {dimension_semantics = [#tpu.dimension_semantics<parallel>], iteration_bounds = array<i64: 1>, scalar_prefetch = 0 : i64, scratch_operands = 0 : i64, tpu.core_type = #tpu.core_type<tc>, window_params = [{transform_indices = @transform_0, window_bounds = array<i64: 8, 768>}, {pipeline_mode = #tpu.pipeline_mode<synchronous>, transform_indices = @transform_1, window_bounds = array<i64: 768, 256>}, {pipeline_mode = #tpu.pipeline_mode<synchronous>, transform_indices = @transform_2, window_bounds = array<i64: 1, 256>}, {pipeline_mode = #tpu.pipeline_mode<synchronous>, transform_indices = @transform_3, window_bounds = array<i64: 256, 256>}, {pipeline_mode = #tpu.pipeline_mode<synchronous>, transform_indices = @transform_4, window_bounds = array<i64: 1, 256>}, {pipeline_mode = #tpu.pipeline_mode<synchronous>, transform_indices = @transform_5, window_bounds = array<i64: 1, 256>}, {pipeline_mode = #tpu.pipeline_mode<synchronous>, transform_indices = @transform_6, window_bounds = array<i64: 1, 256>}, {transform_indices = @transform_7, window_bounds = array<i64: 8, 256>}]} {
    %c0 = arith.constant 0 : index
    %c0_0 = arith.constant 0 : index
    %0 = vector.load %arg1[%c0, %c0_0] : memref<8x768xf32, #tpu.memory_space<vmem>>, vector<8x768xf32>
    %c0_1 = arith.constant 0 : index
    %c0_2 = arith.constant 0 : index
    %1 = vector.load %arg2[%c0_1, %c0_2] : memref<768x256xf32, #tpu.memory_space<vmem>>, vector<768x256xf32>
    %cst = arith.constant dense<0.000000e+00> : vector<8x256xf32>
    %2 = tpu.matmul %0, %1, %cst {dimension_numbers = #tpu.dot_dimension_numbers<[1], [0], [0], [1], [0, 0, 1, 1], [], []>} : vector<8x768xf32>, vector<768x256xf32>, vector<8x256xf32> -> vector<8x256xf32>
    %c0_3 = arith.constant 0 : index
    %c0_4 = arith.constant 0 : index
    %3 = vector.load %arg3[%c0_3, %c0_4] : memref<1x256xf32, #tpu.memory_space<vmem>>, vector<1x256xf32>
    %4 = vector.broadcast %3 : vector<1x256xf32> to vector<8x256xf32>
    %5 = arith.addf %2, %4 : vector<8x256xf32>
    %cst_5 = arith.constant 5.000000e-01 : f32
    %6 = vector.broadcast %cst_5 : f32 to vector<8x256xf32>
    %7 = arith.mulf %6, %5 : vector<8x256xf32>
    %cst_6 = arith.constant 0.707106769 : f32
    %8 = vector.broadcast %cst_6 : f32 to vector<8x256xf32>
    %9 = arith.mulf %5, %8 : vector<8x256xf32>
    %10 = math.erf %9 : vector<8x256xf32>
    %cst_7 = arith.constant 1.000000e+00 : f32
    %11 = vector.broadcast %cst_7 : f32 to vector<8x256xf32>
    %12 = arith.addf %11, %10 : vector<8x256xf32>
    %13 = arith.mulf %7, %12 : vector<8x256xf32>
    %c0_8 = arith.constant 0 : index
    %c0_9 = arith.constant 0 : index
    %14 = vector.load %arg4[%c0_8, %c0_9] : memref<256x256xf32, #tpu.memory_space<vmem>>, vector<256x256xf32>
    %cst_10 = arith.constant dense<0.000000e+00> : vector<8x256xf32>
    %15 = tpu.matmul %13, %14, %cst_10 {dimension_numbers = #tpu.dot_dimension_numbers<[1], [0], [0], [1], [0, 0, 1, 1], [], []>} : vector<8x256xf32>, vector<256x256xf32>, vector<8x256xf32> -> vector<8x256xf32>
    %c0_11 = arith.constant 0 : index
    %c0_12 = arith.constant 0 : index
    %16 = vector.load %arg5[%c0_11, %c0_12] : memref<1x256xf32, #tpu.memory_space<vmem>>, vector<1x256xf32>
    %17 = vector.broadcast %16 : vector<1x256xf32> to vector<8x256xf32>
    %18 = arith.addf %15, %17 : vector<8x256xf32>
    %19 = arith.addf %18, %5 : vector<8x256xf32>
    %cst_13 = arith.constant dense<0.000000e+00> : vector<8xf32>
    %20 = vector.multi_reduction <add>, %19, %cst_13 [1] : vector<8x256xf32> to vector<8xf32>
    %21 = vector.shape_cast %20 : vector<8xf32> to vector<8x1xf32>
    %cst_14 = arith.constant 2.560000e+02 : f32
    %22 = vector.broadcast %cst_14 : f32 to vector<8x1xf32>
    %23 = arith.divf %21, %22 : vector<8x1xf32>
    %24 = vector.broadcast %23 : vector<8x1xf32> to vector<8x256xf32>
    %25 = arith.subf %19, %24 : vector<8x256xf32>
    %26 = arith.mulf %25, %25 : vector<8x256xf32>
    %cst_15 = arith.constant dense<0.000000e+00> : vector<8xf32>
    %27 = vector.multi_reduction <add>, %26, %cst_15 [1] : vector<8x256xf32> to vector<8xf32>
    %28 = vector.shape_cast %27 : vector<8xf32> to vector<8x1xf32>
    %cst_16 = arith.constant 2.560000e+02 : f32
    %29 = vector.broadcast %cst_16 : f32 to vector<8x1xf32>
    %30 = arith.divf %28, %29 : vector<8x1xf32>
    %31 = vector.broadcast %23 : vector<8x1xf32> to vector<8x256xf32>
    %32 = arith.subf %19, %31 : vector<8x256xf32>
    %cst_17 = arith.constant 9.99999974E-6 : f32
    %33 = vector.broadcast %cst_17 : f32 to vector<8x1xf32>
    %34 = arith.addf %30, %33 : vector<8x1xf32>
    %35 = math.rsqrt %34 : vector<8x1xf32>
    %36 = vector.broadcast %35 : vector<8x1xf32> to vector<8x256xf32>
    %37 = arith.mulf %32, %36 : vector<8x256xf32>
    %c0_18 = arith.constant 0 : index
    %c0_19 = arith.constant 0 : index
    %38 = vector.load %arg6[%c0_18, %c0_19] : memref<1x256xf32, #tpu.memory_space<vmem>>, vector<1x256xf32>
    %39 = vector.broadcast %38 : vector<1x256xf32> to vector<8x256xf32>
    %40 = arith.mulf %37, %39 : vector<8x256xf32>
    %c0_20 = arith.constant 0 : index
    %c0_21 = arith.constant 0 : index
    %41 = vector.load %arg7[%c0_20, %c0_21] : memref<1x256xf32, #tpu.memory_space<vmem>>, vector<1x256xf32>
    %42 = vector.broadcast %41 : vector<1x256xf32> to vector<8x256xf32>
    %43 = arith.addf %40, %42 : vector<8x256xf32>
    %c0_22 = arith.constant 0 : index
    %c0_23 = arith.constant 0 : index
    %44 = vector.load %arg8[%c0_22, %c0_23] : memref<8x256xf32, #tpu.memory_space<vmem>>, vector<8x256xf32>
    tpu.vector_store %arg8[%c0_22, %c0_23], %43 {strides = array<i32>} : memref<8x256xf32, #tpu.memory_space<vmem>>, vector<8x256xf32>,
    return
  }
  func.func @transform_0(%arg0: i32) -> (i32, i32) {
    %c0_i32 = arith.constant 0 : i32
    %c0_i32_0 = arith.constant 0 : i32
    return %arg0, %c0_i32 : i32, i32
  }
  func.func @transform_1(%arg0: i32) -> (i32, i32) {
    %c0_i32 = arith.constant 0 : i32
    %c0_i32_0 = arith.constant 0 : i32
    %c0_i32_1 = arith.constant 0 : i32
    return %c0_i32, %c0_i32_0 : i32, i32
  }
  func.func @transform_2(%arg0: i32) -> (i32, i32) {
    %c0_i32 = arith.constant 0 : i32
    %c0_i32_0 = arith.constant 0 : i32
    %c0_i32_1 = arith.constant 0 : i32
    return %c0_i32, %c0_i32_0 : i32, i32
  }
  func.func @transform_3(%arg0: i32) -> (i32, i32) {
    %c0_i32 = arith.constant 0 : i32
    %c0_i32_0 = arith.constant 0 : i32
    %c0_i32_1 = arith.constant 0 : i32
    return %c0_i32, %c0_i32_0 : i32, i32
  }
  func.func @transform_4(%arg0: i32) -> (i32, i32) {
    %c0_i32 = arith.constant 0 : i32
    %c0_i32_0 = arith.constant 0 : i32
    %c0_i32_1 = arith.constant 0 : i32
    return %c0_i32, %c0_i32_0 : i32, i32
  }
  func.func @transform_5(%arg0: i32) -> (i32, i32) {
    %c0_i32 = arith.constant 0 : i32
    %c0_i32_0 = arith.constant 0 : i32
    %c0_i32_1 = arith.constant 0 : i32
    return %c0_i32, %c0_i32_0 : i32, i32
  }
  func.func @transform_6(%arg0: i32) -> (i32, i32) {
    %c0_i32 = arith.constant 0 : i32
    %c0_i32_0 = arith.constant 0 : i32
    %c0_i32_1 = arith.constant 0 : i32
    return %c0_i32, %c0_i32_0 : i32, i32
  }
  func.func @transform_7(%arg0: i32) -> (i32, i32) {
    %c0_i32 = arith.constant 0 : i32
    %c0_i32_0 = arith.constant 0 : i32
    return %arg0, %c0_i32 : i32, i32
  }
}

</mosaic_0001>

<llo_original>
// kernel: tpu_custom_call.1
$region0: #{tpu_custom_call.1}
  #allocation0 [shape = 'u32[]', space=smem, size = 0x4, offset = 0x4, fixed_abs, tag = 'smem constant byte address 0x4 - core index']
  #allocation1 [shape = 'u32[144,128]{1,0:T(1,128)}', space=vmem, size = 0x12000, scoped, tag = 'internal scratch']
  %s0 = inlined_call_operand.hbm [shape: f32[8,768], index: 0, kind: input, shape index: {}]
  %s1 = inlined_call_operand.hbm [shape: f32[768,256], index: 1, kind: input, shape index: {}]
  %s2 = inlined_call_operand.vmem [shape: f32[1,256], index: 2, kind: input, shape index: {}]
  %s3 = inlined_call_operand.hbm [shape: f32[256,256], index: 3, kind: input, shape index: {}]
  %s4 = inlined_call_operand.vmem [shape: f32[1,256], index: 4, kind: input, shape index: {}]
  %s5 = inlined_call_operand.vmem [shape: f32[1,256], index: 5, kind: input, shape index: {}]
  %s6 = inlined_call_operand.vmem [shape: f32[1,256], index: 6, kind: input, shape index: {}]
  %s7 = inlined_call_operand.hbm [shape: f32[8,256], index: 7, kind: output, shape index: {}]
  %s8 = sld [smem:[#allocation0]]
  $region50: #{tpu_custom_call.1} parent=0
    _
  %s10 = ssub.s32 1, %s8
  %s11 = scalar_select 0, %s10, %s8
  $region1: #{tpu_custom_call.1} parent=0
    #allocation2 [shape = 'u8[24576]{0}', space=vmem, size = 0x6000, scoped, tag = 'input window, operand 0, single buffered']
    #allocation3 [shape = 's32[1]{0}', space=sflag, size = 0x4, scoped, tag = 'scoped memory for tpu_custom_call.1']
    #allocation4 [shape = 's32[1]{0}', space=sflag, size = 0x4, scoped, tag = 'scoped memory for tpu_custom_call.1']
    #allocation5 [shape = 'u8[786432]{0}', space=vmem, size = 0xc0000, scoped, tag = 'input window, operand 1, single buffered']
    #allocation6 [shape = 's32[1]{0}', space=sflag, size = 0x4, scoped, tag = 'scoped memory for tpu_custom_call.1']
    #allocation7 [shape = 'u8[262144]{0}', space=vmem, size = 0x40000, scoped, tag = 'input window, operand 3, single buffered']
    #allocation8 [shape = 'u8[8192]{0}', space=vmem, size = 0x2000, scoped, tag = 'output window, operand 0, single buffered']
    %12 = vsyncpa [#allocation3], 0
    %13 = vsyncpa [#allocation6], 0
    %14 = vsyncpa [#allocation4], 0
    // Predicated region
    $region2: #{tpu_custom_call.1} parent=1 // pred_check
      _
    $region3: #{tpu_custom_call.1} parent=1 // pred_check_branch
      %16 = sbr.rel (0) target = $region5
    $region4: #{tpu_custom_call.1} parent=1 // pred_region
      %s18 = ssub.s32 768, 768
      %19 = vsyncadd [#allocation3], %s18
      %s21 = sshll.u32 [#allocation2], 4
      %s22 = int_to_ptr.vmem [resolvable:$true] %s21
      %24 = dma.hbm_to_vmem [thread:$0]  %s0, 768, %s22, [#allocation3]
    $region5: #{tpu_custom_call.1} parent=1 // pred_fallthru
      _
    // Predicated region
    $region6: #{tpu_custom_call.1} parent=1 // pred_check
      _
    $region7: #{tpu_custom_call.1} parent=1 // pred_check_branch
      %26 = sbr.rel (0) target = $region9
    $region8: #{tpu_custom_call.1} parent=1 // pred_region
      %s28 = ssub.s32 24576, 24576
      %29 = vsyncadd [#allocation6], %s28
      %s30 = sshll.u32 [#allocation5], 4
      %s31 = int_to_ptr.vmem [resolvable:$true] %s30
      %36 = dma.hbm_to_vmem [thread:$0]  %s1, 24576, %s31, [#allocation6], 256, 256, 16
    $region9: #{tpu_custom_call.1} parent=1 // pred_fallthru
      _
    // Predicated region
    $region10: #{tpu_custom_call.1} parent=1 // pred_check
      _
    $region11: #{tpu_custom_call.1} parent=1 // pred_check_branch
      %38 = sbr.rel (0) target = $region13
    $region12: #{tpu_custom_call.1} parent=1 // pred_region
      _
    $region13: #{tpu_custom_call.1} parent=1 // pred_fallthru
      _
    // Predicated region
    $region14: #{tpu_custom_call.1} parent=1 // pred_check
      _
    $region15: #{tpu_custom_call.1} parent=1 // pred_check_branch
      %40 = sbr.rel (0) target = $region17
    $region16: #{tpu_custom_call.1} parent=1 // pred_region
      %s42 = ssub.s32 8192, 8192
      %43 = vsyncadd [#allocation6], %s42
      %s44 = sshll.u32 [#allocation7], 4
      %s45 = int_to_ptr.vmem [resolvable:$true] %s44
      %50 = dma.hbm_to_vmem [thread:$0]  %s3, 8192, %s45, [#allocation6], 256, 256, 16
    $region17: #{tpu_custom_call.1} parent=1 // pred_fallthru
      _
    // Predicated region
    $region18: #{tpu_custom_call.1} parent=1 // pred_check
      _
    $region19: #{tpu_custom_call.1} parent=1 // pred_check_branch
      %52 = sbr.rel (0) target = $region21
    $region20: #{tpu_custom_call.1} parent=1 // pred_region
      _
    $region21: #{tpu_custom_call.1} parent=1 // pred_fallthru
      _
    // Predicated region
    $region22: #{tpu_custom_call.1} parent=1 // pred_check
      _
    $region23: #{tpu_custom_call.1} parent=1 // pred_check_branch
      %54 = sbr.rel (0) target = $region25
    $region24: #{tpu_custom_call.1} parent=1 // pred_region
      _
    $region25: #{tpu_custom_call.1} parent=1 // pred_fallthru
      _
    // Predicated region
    $region26: #{tpu_custom_call.1} parent=1 // pred_check
      _
    $region27: #{tpu_custom_call.1} parent=1 // pred_check_branch
      %56 = sbr.rel (0) target = $region29
    $region28: #{tpu_custom_call.1} parent=1 // pred_region
      _
    $region29: #{tpu_custom_call.1} parent=1 // pred_fallthru
      _
    // Predicated region
    $region30: #{tpu_custom_call.1} parent=1 // pred_check
      _
    $region31: #{tpu_custom_call.1} parent=1 // pred_check_branch
      %58 = sbr.rel (0) target = $region33
    $region32: #{tpu_custom_call.1} parent=1 // pred_region
      %59 = dma.done [#allocation3], 768
    $region33: #{tpu_custom_call.1} parent=1 // pred_fallthru
      _
    // Predicated region
    $region34: #{tpu_custom_call.1} parent=1 // pred_check
      _
    $region35: #{tpu_custom_call.1} parent=1 // pred_check_branch
      %61 = sbr.rel (0) target = $region37
    $region36: #{tpu_custom_call.1} parent=1 // pred_region
      %62 = dma.done [#allocation6], 24576
    $region37: #{tpu_custom_call.1} parent=1 // pred_fallthru
      _
    // Predicated region
    $region38: #{tpu_custom_call.1} parent=1 // pred_check
      _
    $region39: #{tpu_custom_call.1} parent=1 // pred_check_branch
      %64 = sbr.rel (0) target = $region41
    $region40: #{tpu_custom_call.1} parent=1 // pred_region
      %65 = dma.done [#allocation6], 8192
    $region41: #{tpu_custom_call.1} parent=1 // pred_fallthru
      _
    %v66 = vld [vmem:[#allocation2] sm:$0xff]
    %v67 = vld [vmem:[#allocation2 + $0x8] sm:$0xff]
    %v68 = vld [vmem:[#allocation2 + $0x10] sm:$0xff]
    %v69 = vld [vmem:[#allocation2 + $0x18] sm:$0xff]
    %v70 = vld [vmem:[#allocation2 + $0x20] sm:$0xff]
    %v71 = vld [vmem:[#allocation2 + $0x28] sm:$0xff]
    %v72 = vld [vmem:[#allocation5] sm:$0xff]
    %v73 = vld [vmem:[#allocation5 + $0x8] sm:$0xff]
    %v74 = vld [vmem:[#allocation5 + $0x10] sm:$0xff]
    %v75 = vld [vmem:[#allocation5 + $0x18] sm:$0xff]
    %v76 = vld [vmem:[#allocation5 + $0x20] sm:$0xff]
    %v77 = vld [vmem:[#allocation5 + $0x28] sm:$0xff]
    %v78 = vld [vmem:[#allocation5 + $0x30] sm:$0xff]
    %v79 = vld [vmem:[#allocation5 + $0x38] sm:$0xff]
    %v80 = vld [vmem:[#allocation5 + $0x40] sm:$0xff]
    %v81 = vld [vmem:[#allocation5 + $0x48] sm:$0xff]
    %v82 = vld [vmem:[#allocation5 + $0x50] sm:$0xff]
    %v83 = vld [vmem:[#allocation5 + $0x58] sm:$0xff]
    %v84 = vld [vmem:[#allocation5 + $0x60] sm:$0xff]
    %v85 = vld [vmem:[#allocation5 + $0x68] sm:$0xff]
    %v86 = vld [vmem:[#allocation5 + $0x70] sm:$0xff]
    %v87 = vld [vmem:[#allocation5 + $0x78] sm:$0xff]
    %v88 = vld [vmem:[#allocation5 + $0x80] sm:$0xff]
    %v89 = vld [vmem:[#allocation5 + $0x88] sm:$0xff]
    %v90 = vld [vmem:[#allocation5 + $0x90] sm:$0xff]
    %v91 = vld [vmem:[#allocation5 + $0x98] sm:$0xff]
    %v92 = vld [vmem:[#allocation5 + $0xa0] sm:$0xff]
    %v93 = vld [vmem:[#allocation5 + $0xa8] sm:$0xff]
    %v94 = vld [vmem:[#allocation5 + $0xb0] sm:$0xff]
    %v95 = vld [vmem:[#allocation5 + $0xb8] sm:$0xff]
    %v96 = vld [vmem:[#allocation5 + $0xc0] sm:$0xff]
    %v97 = vld [vmem:[#allocation5 + $0xc8] sm:$0xff]
    %v98 = vld [vmem:[#allocation5 + $0xd0] sm:$0xff]
    %v99 = vld [vmem:[#allocation5 + $0xd8] sm:$0xff]
    %v100 = vld [vmem:[#allocation5 + $0xe0] sm:$0xff]
    %v101 = vld [vmem:[#allocation5 + $0xe8] sm:$0xff]
    %v102 = vld [vmem:[#allocation5 + $0xf0] sm:$0xff]
    %v103 = vld [vmem:[#allocation5 + $0xf8] sm:$0xff]
    %v104 = vld [vmem:[#allocation5 + $0x100] sm:$0xff]
    %v105 = vld [vmem:[#allocation5 + $0x108] sm:$0xff]
    %v106 = vld [vmem:[#allocation5 + $0x110] sm:$0xff]
    %v107 = vld [vmem:[#allocation5 + $0x118] sm:$0xff]
    %v108 = vld [vmem:[#allocation5 + $0x120] sm:$0xff]
    %v109 = vld [vmem:[#allocation5 + $0x128] sm:$0xff]
    %v110 = vld [vmem:[#allocation5 + $0x130] sm:$0xff]
    %v111 = vld [vmem:[#allocation5 + $0x138] sm:$0xff]
    %v112 = vld [vmem:[#allocation5 + $0x140] sm:$0xff]
    %v113 = vld [vmem:[#allocation5 + $0x148] sm:$0xff]
    %v114 = vld [vmem:[#allocation5 + $0x150] sm:$0xff]
    %v115 = vld [vmem:[#allocation5 + $0x158] sm:$0xff]
    %v116 = vld [vmem:[#allocation5 + $0x160] sm:$0xff]
    %v117 = vld [vmem:[#allocation5 + $0x168] sm:$0xff]
    %v118 = vld [vmem:[#allocation5 + $0x170] sm:$0xff]
    %v119 = vld [vmem:[#allocation5 + $0x178] sm:$0xff]
    %v120 = vld [vmem:[#allocation5 + $0x180] sm:$0xff]
    %v121 = vld [vmem:[#allocation5 + $0x188] sm:$0xff]
    %v122 = vld [vmem:[#allocation5 + $0x190] sm:$0xff]
    %v123 = vld [vmem:[#allocation5 + $0x198] sm:$0xff]
    %v124 = vld [vmem:[#allocation5 + $0x1a0] sm:$0xff]
    %v125 = vld [vmem:[#allocation5 + $0x1a8] sm:$0xff]
    %v126 = vld [vmem:[#allocation5 + $0x1b0] sm:$0xff]
    %v127 = vld [vmem:[#allocation5 + $0x1b8] sm:$0xff]
    %v128 = vld [vmem:[#allocation5 + $0x1c0] sm:$0xff]
    %v129 = vld [vmem:[#allocation5 + $0x1c8] sm:$0xff]
    %v130 = vld [vmem:[#allocation5 + $0x1d0] sm:$0xff]
    %v131 = vld [vmem:[#allocation5 + $0x1d8] sm:$0xff]
    %v132 = vld [vmem:[#allocation5 + $0x1e0] sm:$0xff]
    %v133 = vld [vmem:[#allocation5 + $0x1e8] sm:$0xff]
    %v134 = vld [vmem:[#allocation5 + $0x1f0] sm:$0xff]
    %v135 = vld [vmem:[#allocation5 + $0x1f8] sm:$0xff]
    %v136 = vld [vmem:[#allocation5 + $0x200] sm:$0xff]
    %v137 = vld [vmem:[#allocation5 + $0x208] sm:$0xff]
    %v138 = vld [vmem:[#allocation5 + $0x210] sm:$0xff]
    %v139 = vld [vmem:[#allocation5 + $0x218] sm:$0xff]
    %v140 = vld [vmem:[#allocation5 + $0x220] sm:$0xff]
    %v141 = vld [vmem:[#allocation5 + $0x228] sm:$0xff]
    %v142 = vld [vmem:[#allocation5 + $0x230] sm:$0xff]
    %v143 = vld [vmem:[#allocation5 + $0x238] sm:$0xff]
    %v144 = vld [vmem:[#allocation5 + $0x240] sm:$0xff]
    %v145 = vld [vmem:[#allocation5 + $0x248] sm:$0xff]
    %v146 = vld [vmem:[#allocation5 + $0x250] sm:$0xff]
    %v147 = vld [vmem:[#allocation5 + $0x258] sm:$0xff]
    %v148 = vld [vmem:[#allocation5 + $0x260] sm:$0xff]
    %v149 = vld [vmem:[#allocation5 + $0x268] sm:$0xff]
    %v150 = vld [vmem:[#allocation5 + $0x270] sm:$0xff]
    %v151 = vld [vmem:[#allocation5 + $0x278] sm:$0xff]
    %v152 = vld [vmem:[#allocation5 + $0x280] sm:$0xff]
    %v153 = vld [vmem:[#allocation5 + $0x288] sm:$0xff]
    %v154 = vld [vmem:[#allocation5 + $0x290] sm:$0xff]
    %v155 = vld [vmem:[#allocation5 + $0x298] sm:$0xff]
    %v156 = vld [vmem:[#allocation5 + $0x2a0] sm:$0xff]
    %v157 = vld [vmem:[#allocation5 + $0x2a8] sm:$0xff]
    %v158 = vld [vmem:[#allocation5 + $0x2b0] sm:$0xff]
    %v159 = vld [vmem:[#allocation5 + $0x2b8] sm:$0xff]
    %v160 = vld [vmem:[#allocation5 + $0x2c0] sm:$0xff]
    %v161 = vld [vmem:[#allocation5 + $0x2c8] sm:$0xff]
    %v162 = vld [vmem:[#allocation5 + $0x2d0] sm:$0xff]
    %v163 = vld [vmem:[#allocation5 + $0x2d8] sm:$0xff]
    %v164 = vld [vmem:[#allocation5 + $0x2e0] sm:$0xff]
    %v165 = vld [vmem:[#allocation5 + $0x2e8] sm:$0xff]
    %v166 = vld [vmem:[#allocation5 + $0x2f0] sm:$0xff]
    %v167 = vld [vmem:[#allocation5 + $0x2f8] sm:$0xff]
    %v168 = vld [vmem:[#allocation5 + $0x300] sm:$0xff]
    %v169 = vld [vmem:[#allocation5 + $0x308] sm:$0xff]
    %v170 = vld [vmem:[#allocation5 + $0x310] sm:$0xff]
    %v171 = vld [vmem:[#allocation5 + $0x318] sm:$0xff]
    %v172 = vld [vmem:[#allocation5 + $0x320] sm:$0xff]
    %v173 = vld [vmem:[#allocation5 + $0x328] sm:$0xff]
    %v174 = vld [vmem:[#allocation5 + $0x330] sm:$0xff]
    %v175 = vld [vmem:[#allocation5 + $0x338] sm:$0xff]
    %v176 = vld [vmem:[#allocation5 + $0x340] sm:$0xff]
    %v177 = vld [vmem:[#allocation5 + $0x348] sm:$0xff]
    %v178 = vld [vmem:[#allocation5 + $0x350] sm:$0xff]
    %v179 = vld [vmem:[#allocation5 + $0x358] sm:$0xff]
    %v180 = vld [vmem:[#allocation5 + $0x360] sm:$0xff]
    %v181 = vld [vmem:[#allocation5 + $0x368] sm:$0xff]
    %v182 = vld [vmem:[#allocation5 + $0x370] sm:$0xff]
    %v183 = vld [vmem:[#allocation5 + $0x378] sm:$0xff]
    %v184 = vld [vmem:[#allocation5 + $0x380] sm:$0xff]
    %v185 = vld [vmem:[#allocation5 + $0x388] sm:$0xff]
    %v186 = vld [vmem:[#allocation5 + $0x390] sm:$0xff]
    %v187 = vld [vmem:[#allocation5 + $0x398] sm:$0xff]
    %v188 = vld [vmem:[#allocation5 + $0x3a0] sm:$0xff]
    %v189 = vld [vmem:[#allocation5 + $0x3a8] sm:$0xff]
    %v190 = vld [vmem:[#allocation5 + $0x3b0] sm:$0xff]
    %v191 = vld [vmem:[#allocation5 + $0x3b8] sm:$0xff]
    %v192 = vld [vmem:[#allocation5 + $0x3c0] sm:$0xff]
    %v193 = vld [vmem:[#allocation5 + $0x3c8] sm:$0xff]
    %v194 = vld [vmem:[#allocation5 + $0x3d0] sm:$0xff]
    %v195 = vld [vmem:[#allocation5 + $0x3d8] sm:$0xff]
    %v196 = vld [vmem:[#allocation5 + $0x3e0] sm:$0xff]
    %v197 = vld [vmem:[#allocation5 + $0x3e8] sm:$0xff]
    %v198 = vld [vmem:[#allocation5 + $0x3f0] sm:$0xff]
    %v199 = vld [vmem:[#allocation5 + $0x3f8] sm:$0xff]
    %v200 = vld [vmem:[#allocation5 + $0x400] sm:$0xff]
    %v201 = vld [vmem:[#allocation5 + $0x408] sm:$0xff]
    %v202 = vld [vmem:[#allocation5 + $0x410] sm:$0xff]
    %v203 = vld [vmem:[#allocation5 + $0x418] sm:$0xff]
    %v204 = vld [vmem:[#allocation5 + $0x420] sm:$0xff]
    %v205 = vld [vmem:[#allocation5 + $0x428] sm:$0xff]
    %v206 = vld [vmem:[#allocation5 + $0x430] sm:$0xff]
    %v207 = vld [vmem:[#allocation5 + $0x438] sm:$0xff]
    %v208 = vld [vmem:[#allocation5 + $0x440] sm:$0xff]
    %v209 = vld [vmem:[#allocation5 + $0x448] sm:$0xff]
    %v210 = vld [vmem:[#allocation5 + $0x450] sm:$0xff]
    %v211 = vld [vmem:[#allocation5 + $0x458] sm:$0xff]
    %v212 = vld [vmem:[#allocation5 + $0x460] sm:$0xff]
    %v213 = vld [vmem:[#allocation5 + $0x468] sm:$0xff]
    %v214 = vld [vmem:[#allocation5 + $0x470] sm:$0xff]
    %v215 = vld [vmem:[#allocation5 + $0x478] sm:$0xff]
    %v216 = vld [vmem:[#allocation5 + $0x480] sm:$0xff]
    %v217 = vld [vmem:[#allocation5 + $0x488] sm:$0xff]
    %v218 = vld [vmem:[#allocation5 + $0x490] sm:$0xff]
    %v219 = vld [vmem:[#allocation5 + $0x498] sm:$0xff]
    %v220 = vld [vmem:[#allocation5 + $0x4a0] sm:$0xff]
    %v221 = vld [vmem:[#allocation5 + $0x4a8] sm:$0xff]
    %v222 = vld [vmem:[#allocation5 + $0x4b0] sm:$0xff]
    %v223 = vld [vmem:[#allocation5 + $0x4b8] sm:$0xff]
    %v224 = vld [vmem:[#allocation5 + $0x4c0] sm:$0xff]
    %v225 = vld [vmem:[#allocation5 + $0x4c8] sm:$0xff]
    %v226 = vld [vmem:[#allocation5 + $0x4d0] sm:$0xff]
    %v227 = vld [vmem:[#allocation5 + $0x4d8] sm:$0xff]
    %v228 = vld [vmem:[#allocation5 + $0x4e0] sm:$0xff]
    %v229 = vld [vmem:[#allocation5 + $0x4e8] sm:$0xff]
    %v230 = vld [vmem:[#allocation5 + $0x4f0] sm:$0xff]
    %v231 = vld [vmem:[#allocation5 + $0x4f8] sm:$0xff]
    %v232 = vld [vmem:[#allocation5 + $0x500] sm:$0xff]
    %v233 = vld [vmem:[#allocation5 + $0x508] sm:$0xff]
    %v234 = vld [vmem:[#allocation5 + $0x510] sm:$0xff]
    %v235 = vld [vmem:[#allocation5 + $0x518] sm:$0xff]
    %v236 = vld [vmem:[#allocation5 + $0x520] sm:$0xff]
    %v237 = vld [vmem:[#allocation5 + $0x528] sm:$0xff]
    %v238 = vld [vmem:[#allocation5 + $0x530] sm:$0xff]
    %v239 = vld [vmem:[#allocation5 + $0x538] sm:$0xff]
    %v240 = vld [vmem:[#allocation5 + $0x540] sm:$0xff]
    %v241 = vld [vmem:[#allocation5 + $0x548] sm:$0xff]
    %v242 = vld [vmem:[#allocation5 + $0x550] sm:$0xff]
    %v243 = vld [vmem:[#allocation5 + $0x558] sm:$0xff]
    %v244 = vld [vmem:[#allocation5 + $0x560] sm:$0xff]
    %v245 = vld [vmem:[#allocation5 + $0x568] sm:$0xff]
    %v246 = vld [vmem:[#allocation5 + $0x570] sm:$0xff]
    %v247 = vld [vmem:[#allocation5 + $0x578] sm:$0xff]
    %v248 = vld [vmem:[#allocation5 + $0x580] sm:$0xff]
    %v249 = vld [vmem:[#allocation5 + $0x588] sm:$0xff]
    %v250 = vld [vmem:[#allocation5 + $0x590] sm:$0xff]
    %v251 = vld [vmem:[#allocation5 + $0x598] sm:$0xff]
    %v252 = vld [vmem:[#allocation5 + $0x5a0] sm:$0xff]
    %v253 = vld [vmem:[#allocation5 + $0x5a8] sm:$0xff]
    %v254 = vld [vmem:[#allocation5 + $0x5b0] sm:$0xff]
    %v255 = vld [vmem:[#allocation5 + $0x5b8] sm:$0xff]
    %v256 = vld [vmem:[#allocation5 + $0x5c0] sm:$0xff]
    %v257 = vld [vmem:[#allocation5 + $0x5c8] sm:$0xff]
    %v258 = vld [vmem:[#allocation5 + $0x5d0] sm:$0xff]
    %v259 = vld [vmem:[#allocation5 + $0x5d8] sm:$0xff]
    %v260 = vld [vmem:[#allocation5 + $0x5e0] sm:$0xff]
    %v261 = vld [vmem:[#allocation5 + $0x5e8] sm:$0xff]
    %v262 = vld [vmem:[#allocation5 + $0x5f0] sm:$0xff]
    %v263 = vld [vmem:[#allocation5 + $0x5f8] sm:$0xff]
    %v264 = vld [vmem:[%s2] sm:$0x3]
    %v266 = vlaneseq
    %v267 = vshrl.u32 %v266, 7
    %v268 = vsub.s32 0, %v267
    %v269 = vrot.slane %v264, %v268
    %v270 = vlaneseq
    %v271 = vshrl.u32 %v270, 7
    %v272 = vsub.s32 1, %v271
    %v273 = vrot.slane %v264, %v272
    %276 = vmatprep.subr.mxu0 %v103
    %277 = vmatpush1.msra.mxu0 %v102
    %278 = vmatprep.subr.mxu0 %v101
    %279 = vmatpush1.msra.mxu0 %v100
    %280 = vmatprep.subr.mxu0 %v99
    %281 = vmatpush1.msra.mxu0 %v98
    %282 = vmatprep.subr.mxu0 %v97
    %283 = vmatpush1.msra.mxu0 %v96
    %284 = vmatprep.subr.mxu0 %v95
    %285 = vmatpush1.msra.mxu0 %v94
    %286 = vmatprep.subr.mxu0 %v93
    %287 = vmatpush1.msra.mxu0 %v92
    %288 = vmatprep.subr.mxu0 %v91
    %289 = vmatpush1.msra.mxu0 %v90
    %290 = vmatprep.subr.mxu0 %v89
    %291 = vmatpush1.msra.mxu0 %v88
    %292 = vmatprep.subr.mxu0 %v87
    %293 = vmatpush1.msra.mxu0 %v86
    %294 = vmatprep.subr.mxu0 %v85
    %295 = vmatpush1.msra.mxu0 %v84
    %296 = vmatprep.subr.mxu0 %v83
    %297 = vmatpush1.msra.mxu0 %v82
    %298 = vmatprep.subr.mxu0 %v81
    %299 = vmatpush1.msra.mxu0 %v80
    %300 = vmatprep.subr.mxu0 %v79
    %301 = vmatpush1.msra.mxu0 %v78
    %302 = vmatprep.subr.mxu0 %v77
    %303 = vmatpush1.msra.mxu0 %v76
    %304 = vmatprep.subr.mxu0 %v75
    %305 = vmatpush1.msra.mxu0 %v74
    %306 = vmatprep.subr.mxu0 %v73
    %307 = vmatpush1.msra.mxu0 %v72
    %308 = vmatprep.subr.mxu0 %v135
    %309 = vmatpush2.msra.mxu0 %v134
    %310 = vmatprep.subr.mxu0 %v133
    %311 = vmatpush2.msra.mxu0 %v132
    %312 = vmatprep.subr.mxu0 %v131
    %313 = vmatpush2.msra.mxu0 %v130
    %314 = vmatprep.subr.mxu0 %v129
    %315 = vmatpush2.msra.mxu0 %v128
    %316 = vmatprep.subr.mxu0 %v127
    %317 = vmatpush2.msra.mxu0 %v126
    %318 = vmatprep.subr.mxu0 %v125
    %319 = vmatpush2.msra.mxu0 %v124
    %320 = vmatprep.subr.mxu0 %v123
    %321 = vmatpush2.msra.mxu0 %v122
    %322 = vmatprep.subr.mxu0 %v121
    %323 = vmatpush2.msra.mxu0 %v120
    %324 = vmatprep.subr.mxu0 %v119
    %325 = vmatpush2.msra.mxu0 %v118
    %326 = vmatprep.subr.mxu0 %v117
    %327 = vmatpush2.msra.mxu0 %v116
    %328 = vmatprep.subr.mxu0 %v115
    %329 = vmatpush2.msra.mxu0 %v114
    %330 = vmatprep.subr.mxu0 %v113
    %331 = vmatpush2.msra.mxu0 %v112
    %332 = vmatprep.subr.mxu0 %v111
    %333 = vmatpush2.msra.mxu0 %v110
    %334 = vmatprep.subr.mxu0 %v109
    %335 = vmatpush2.msra.mxu0 %v108
    %336 = vmatprep.subr.mxu0 %v107
    %337 = vmatpush2.msra.mxu0 %v106
    %338 = vmatprep.subr.mxu0 %v105
    %339 = vmatpush2.msra.mxu0 %v104
    %340 = vmatprep.mubr.f32.mxu0 %v67
    %341 = vmatmul.mubr.f32.gmra.mxu0 %v66
    %v342 = vpop.f32.mrf.mxu0
    %v343 = vadd.f32 %v269, %v342
    %v344 = vpop.f32.mrf.mxu0
    %v345 = vadd.f32 %v273, %v344
    %346 = vdwg.mxu0
    %347 = vmatprep.subr.mxu0 %v167
    %348 = vmatpush1.msra.mxu0 %v166
    %349 = vmatprep.subr.mxu0 %v165
    %350 = vmatpush1.msra.mxu0 %v164
    %351 = vmatprep.subr.mxu0 %v163
    %352 = vmatpush1.msra.mxu0 %v162
    %353 = vmatprep.subr.mxu0 %v161
    %354 = vmatpush1.msra.mxu0 %v160
    %355 = vmatprep.subr.mxu0 %v159
    %356 = vmatpush1.msra.mxu0 %v158
    %357 = vmatprep.subr.mxu0 %v157
    %358 = vmatpush1.msra.mxu0 %v156
    %359 = vmatprep.subr.mxu0 %v155
    %360 = vmatpush1.msra.mxu0 %v154
    %361 = vmatprep.subr.mxu0 %v153
    %362 = vmatpush1.msra.mxu0 %v152
    %363 = vmatprep.subr.mxu0 %v151
    %364 = vmatpush1.msra.mxu0 %v150
    %365 = vmatprep.subr.mxu0 %v149
    %366 = vmatpush1.msra.mxu0 %v148
    %367 = vmatprep.subr.mxu0 %v147
    %368 = vmatpush1.msra.mxu0 %v146
    %369 = vmatprep.subr.mxu0 %v145
    %370 = vmatpush1.msra.mxu0 %v144
    %371 = vmatprep.subr.mxu0 %v143
    %372 = vmatpush1.msra.mxu0 %v142
    %373 = vmatprep.subr.mxu0 %v141
    %374 = vmatpush1.msra.mxu0 %v140
    %375 = vmatprep.subr.mxu0 %v139
    %376 = vmatpush1.msra.mxu0 %v138
    %377 = vmatprep.subr.mxu0 %v137
    %378 = vmatpush1.msra.mxu0 %v136
    %379 = vmatprep.subr.mxu0 %v199
    %380 = vmatpush2.msra.mxu0 %v198
    %381 = vmatprep.subr.mxu0 %v197
    %382 = vmatpush2.msra.mxu0 %v196
    %383 = vmatprep.subr.mxu0 %v195
    %384 = vmatpush2.msra.mxu0 %v194
    %385 = vmatprep.subr.mxu0 %v193
    %386 = vmatpush2.msra.mxu0 %v192
    %387 = vmatprep.subr.mxu0 %v191
    %388 = vmatpush2.msra.mxu0 %v190
    %389 = vmatprep.subr.mxu0 %v189
    %390 = vmatpush2.msra.mxu0 %v188
    %391 = vmatprep.subr.mxu0 %v187
    %392 = vmatpush2.msra.mxu0 %v186
    %393 = vmatprep.subr.mxu0 %v185
    %394 = vmatpush2.msra.mxu0 %v184
    %395 = vmatprep.subr.mxu0 %v183
    %396 = vmatpush2.msra.mxu0 %v182
    %397 = vmatprep.subr.mxu0 %v181
    %398 = vmatpush2.msra.mxu0 %v180
    %399 = vmatprep.subr.mxu0 %v179
    %400 = vmatpush2.msra.mxu0 %v178
    %401 = vmatprep.subr.mxu0 %v177
    %402 = vmatpush2.msra.mxu0 %v176
    %403 = vmatprep.subr.mxu0 %v175
    %404 = vmatpush2.msra.mxu0 %v174
    %405 = vmatprep.subr.mxu0 %v173
    %406 = vmatpush2.msra.mxu0 %v172
    %407 = vmatprep.subr.mxu0 %v171
    %408 = vmatpush2.msra.mxu0 %v170
    %409 = vmatprep.subr.mxu0 %v169
    %410 = vmatpush2.msra.mxu0 %v168
    %411 = vmatprep.mubr.f32.mxu0 %v69
    %412 = vmatmul.mubr.f32.gmra.mxu0 %v68
    %v413 = vpop.f32.mrf.mxu0
    %v414 = vadd.f32 %v343, %v413
    %v415 = vpop.f32.mrf.mxu0
    %v416 = vadd.f32 %v345, %v415
    %417 = vdwg.mxu0
    %418 = vmatprep.subr.mxu0 %v231
    %419 = vmatpush1.msra.mxu0 %v230
    %420 = vmatprep.subr.mxu0 %v229
    %421 = vmatpush1.msra.mxu0 %v228
    %422 = vmatprep.subr.mxu0 %v227
    %423 = vmatpush1.msra.mxu0 %v226
    %424 = vmatprep.subr.mxu0 %v225
    %425 = vmatpush1.msra.mxu0 %v224
    %426 = vmatprep.subr.mxu0 %v223
    %427 = vmatpush1.msra.mxu0 %v222
    %428 = vmatprep.subr.mxu0 %v221
    %429 = vmatpush1.msra.mxu0 %v220
    %430 = vmatprep.subr.mxu0 %v219
    %431 = vmatpush1.msra.mxu0 %v218
    %432 = vmatprep.subr.mxu0 %v217
    %433 = vmatpush1.msra.mxu0 %v216
    %434 = vmatprep.subr.mxu0 %v215
    %435 = vmatpush1.msra.mxu0 %v214
    %436 = vmatprep.subr.mxu0 %v213
    %437 = vmatpush1.msra.mxu0 %v212
    %438 = vmatprep.subr.mxu0 %v211
    %439 = vmatpush1.msra.mxu0 %v210
    %440 = vmatprep.subr.mxu0 %v209
    %441 = vmatpush1.msra.mxu0 %v208
    %442 = vmatprep.subr.mxu0 %v207
    %443 = vmatpush1.msra.mxu0 %v206
    %444 = vmatprep.subr.mxu0 %v205
    %445 = vmatpush1.msra.mxu0 %v204
    %446 = vmatprep.subr.mxu0 %v203
    %447 = vmatpush1.msra.mxu0 %v202
    %448 = vmatprep.subr.mxu0 %v201
    %449 = vmatpush1.msra.mxu0 %v200
    %450 = vmatprep.subr.mxu0 %v263
    %451 = vmatpush2.msra.mxu0 %v262
    %452 = vmatprep.subr.mxu0 %v261
    %453 = vmatpush2.msra.mxu0 %v260
    %454 = vmatprep.subr.mxu0 %v259
    %455 = vmatpush2.msra.mxu0 %v258
    %456 = vmatprep.subr.mxu0 %v257
    %457 = vmatpush2.msra.mxu0 %v256
    %458 = vmatprep.subr.mxu0 %v255
    %459 = vmatpush2.msra.mxu0 %v254
    %460 = vmatprep.subr.mxu0 %v253
    %461 = vmatpush2.msra.mxu0 %v252
    %462 = vmatprep.subr.mxu0 %v251
    %463 = vmatpush2.msra.mxu0 %v250
    %464 = vmatprep.subr.mxu0 %v249
    %465 = vmatpush2.msra.mxu0 %v248
    %466 = vmatprep.subr.mxu0 %v247
    %467 = vmatpush2.msra.mxu0 %v246
    %468 = vmatprep.subr.mxu0 %v245
    %469 = vmatpush2.msra.mxu0 %v244
    %470 = vmatprep.subr.mxu0 %v243
    %471 = vmatpush2.msra.mxu0 %v242
    %472 = vmatprep.subr.mxu0 %v241
    %473 = vmatpush2.msra.mxu0 %v240
    %474 = vmatprep.subr.mxu0 %v239
    %475 = vmatpush2.msra.mxu0 %v238
    %476 = vmatprep.subr.mxu0 %v237
    %477 = vmatpush2.msra.mxu0 %v236
    %478 = vmatprep.subr.mxu0 %v235
    %479 = vmatpush2.msra.mxu0 %v234
    %480 = vmatprep.subr.mxu0 %v233
    %481 = vmatpush2.msra.mxu0 %v232
    %482 = vmatprep.mubr.f32.mxu0 %v71
    %483 = vmatmul.mubr.f32.gmra.mxu0 %v70
    %v484 = vpop.f32.mrf.mxu0
    %v485 = vadd.f32 %v414, %v484
    %v486 = vpop.f32.mrf.mxu0
    %v487 = vadd.f32 %v416, %v486
    %488 = vdwg.mxu0
    %v489 = vmul.f32 %v485, 0.5
    %v490 = vmul.f32 %v487, 0.5
    %v491 = vmul.f32 %v485, 0.70710677
    %v492 = vmul.f32 %v487, 0.70710677
    %v493 = verf.f32.pop %v491
    %v494 = verf.f32.pop %v492
    %v495 = vadd.f32 %v493, 1.0
    %v496 = vadd.f32 %v494, 1.0
    %v497 = vmul.f32 %v489, %v495
    %v498 = vmul.f32 %v490, %v496
    %v499 = vld [vmem:[#allocation7] sm:$0xff]
    %v500 = vld [vmem:[#allocation7 + $0x8] sm:$0xff]
    %v501 = vld [vmem:[#allocation7 + $0x10] sm:$0xff]
    %v502 = vld [vmem:[#allocation7 + $0x18] sm:$0xff]
    %v503 = vld [vmem:[#allocation7 + $0x20] sm:$0xff]
    %v504 = vld [vmem:[#allocation7 + $0x28] sm:$0xff]
    %v505 = vld [vmem:[#allocation7 + $0x30] sm:$0xff]
    %v506 = vld [vmem:[#allocation7 + $0x38] sm:$0xff]
    %v507 = vld [vmem:[#allocation7 + $0x40] sm:$0xff]
    %v508 = vld [vmem:[#allocation7 + $0x48] sm:$0xff]
    %v509 = vld [vmem:[#allocation7 + $0x50] sm:$0xff]
    %v510 = vld [vmem:[#allocation7 + $0x58] sm:$0xff]
    %v511 = vld [vmem:[#allocation7 + $0x60] sm:$0xff]
    %v512 = vld [vmem:[#allocation7 + $0x68] sm:$0xff]
    %v513 = vld [vmem:[#allocation7 + $0x70] sm:$0xff]
    %v514 = vld [vmem:[#allocation7 + $0x78] sm:$0xff]
    %v515 = vld [vmem:[#allocation7 + $0x80] sm:$0xff]
    %v516 = vld [vmem:[#allocation7 + $0x88] sm:$0xff]
    %v517 = vld [vmem:[#allocation7 + $0x90] sm:$0xff]
    %v518 = vld [vmem:[#allocation7 + $0x98] sm:$0xff]
    %v519 = vld [vmem:[#allocation7 + $0xa0] sm:$0xff]
    %v520 = vld [vmem:[#allocation7 + $0xa8] sm:$0xff]
    %v521 = vld [vmem:[#allocation7 + $0xb0] sm:$0xff]
    %v522 = vld [vmem:[#allocation7 + $0xb8] sm:$0xff]
    %v523 = vld [vmem:[#allocation7 + $0xc0] sm:$0xff]
    %v524 = vld [vmem:[#allocation7 + $0xc8] sm:$0xff]
    %v525 = vld [vmem:[#allocation7 + $0xd0] sm:$0xff]
    %v526 = vld [vmem:[#allocation7 + $0xd8] sm:$0xff]
    %v527 = vld [vmem:[#allocation7 + $0xe0] sm:$0xff]
    %v528 = vld [vmem:[#allocation7 + $0xe8] sm:$0xff]
    %v529 = vld [vmem:[#allocation7 + $0xf0] sm:$0xff]
    %v530 = vld [vmem:[#allocation7 + $0xf8] sm:$0xff]
    %v531 = vld [vmem:[#allocation7 + $0x100] sm:$0xff]
    %v532 = vld [vmem:[#allocation7 + $0x108] sm:$0xff]
    %v533 = vld [vmem:[#allocation7 + $0x110] sm:$0xff]
    %v534 = vld [vmem:[#allocation7 + $0x118] sm:$0xff]
    %v535 = vld [vmem:[#allocation7 + $0x120] sm:$0xff]
    %v536 = vld [vmem:[#allocation7 + $0x128] sm:$0xff]
    %v537 = vld [vmem:[#allocation7 + $0x130] sm:$0xff]
    %v538 = vld [vmem:[#allocation7 + $0x138] sm:$0xff]
    %v539 = vld [vmem:[#allocation7 + $0x140] sm:$0xff]
    %v540 = vld [vmem:[#allocation7 + $0x148] sm:$0xff]
    %v541 = vld [vmem:[#allocation7 + $0x150] sm:$0xff]
    %v542 = vld [vmem:[#allocation7 + $0x158] sm:$0xff]
    %v543 = vld [vmem:[#allocation7 + $0x160] sm:$0xff]
    %v544 = vld [vmem:[#allocation7 + $0x168] sm:$0xff]
    %v545 = vld [vmem:[#allocation7 + $0x170] sm:$0xff]
    %v546 = vld [vmem:[#allocation7 + $0x178] sm:$0xff]
    %v547 = vld [vmem:[#allocation7 + $0x180] sm:$0xff]
    %v548 = vld [vmem:[#allocation7 + $0x188] sm:$0xff]
    %v549 = vld [vmem:[#allocation7 + $0x190] sm:$0xff]
    %v550 = vld [vmem:[#allocation7 + $0x198] sm:$0xff]
    %v551 = vld [vmem:[#allocation7 + $0x1a0] sm:$0xff]
    %v552 = vld [vmem:[#allocation7 + $0x1a8] sm:$0xff]
    %v553 = vld [vmem:[#allocation7 + $0x1b0] sm:$0xff]
    %v554 = vld [vmem:[#allocation7 + $0x1b8] sm:$0xff]
    %v555 = vld [vmem:[#allocation7 + $0x1c0] sm:$0xff]
    %v556 = vld [vmem:[#allocation7 + $0x1c8] sm:$0xff]
    %v557 = vld [vmem:[#allocation7 + $0x1d0] sm:$0xff]
    %v558 = vld [vmem:[#allocation7 + $0x1d8] sm:$0xff]
    %v559 = vld [vmem:[#allocation7 + $0x1e0] sm:$0xff]
    %v560 = vld [vmem:[#allocation7 + $0x1e8] sm:$0xff]
    %v561 = vld [vmem:[#allocation7 + $0x1f0] sm:$0xff]
    %v562 = vld [vmem:[#allocation7 + $0x1f8] sm:$0xff]
    %v563 = vld [vmem:[%s4] sm:$0x3]
    %v565 = vlaneseq
    %v566 = vshrl.u32 %v565, 7
    %v567 = vsub.s32 0, %v566
    %v568 = vrot.slane %v563, %v567
    %v569 = vlaneseq
    %v570 = vshrl.u32 %v569, 7
    %v571 = vsub.s32 1, %v570
    %v572 = vrot.slane %v563, %v571
    %575 = vmatprep.subr.mxu0 %v530
    %576 = vmatpush1.msra.mxu0 %v529
    %577 = vmatprep.subr.mxu0 %v528
    %578 = vmatpush1.msra.mxu0 %v527
    %579 = vmatprep.subr.mxu0 %v526
    %580 = vmatpush1.msra.mxu0 %v525
    %581 = vmatprep.subr.mxu0 %v524
    %582 = vmatpush1.msra.mxu0 %v523
    %583 = vmatprep.subr.mxu0 %v522
    %584 = vmatpush1.msra.mxu0 %v521
    %585 = vmatprep.subr.mxu0 %v520
    %586 = vmatpush1.msra.mxu0 %v519
    %587 = vmatprep.subr.mxu0 %v518
    %588 = vmatpush1.msra.mxu0 %v517
    %589 = vmatprep.subr.mxu0 %v516
    %590 = vmatpush1.msra.mxu0 %v515
    %591 = vmatprep.subr.mxu0 %v514
    %592 = vmatpush1.msra.mxu0 %v513
    %593 = vmatprep.subr.mxu0 %v512
    %594 = vmatpush1.msra.mxu0 %v511
    %595 = vmatprep.subr.mxu0 %v510
    %596 = vmatpush1.msra.mxu0 %v509
    %597 = vmatprep.subr.mxu0 %v508
    %598 = vmatpush1.msra.mxu0 %v507
    %599 = vmatprep.subr.mxu0 %v506
    %600 = vmatpush1.msra.mxu0 %v505
    %601 = vmatprep.subr.mxu0 %v504
    %602 = vmatpush1.msra.mxu0 %v503
    %603 = vmatprep.subr.mxu0 %v502
    %604 = vmatpush1.msra.mxu0 %v501
    %605 = vmatprep.subr.mxu0 %v500
    %606 = vmatpush1.msra.mxu0 %v499
    %607 = vmatprep.subr.mxu0 %v562
    %608 = vmatpush2.msra.mxu0 %v561
    %609 = vmatprep.subr.mxu0 %v560
    %610 = vmatpush2.msra.mxu0 %v559
    %611 = vmatprep.subr.mxu0 %v558
    %612 = vmatpush2.msra.mxu0 %v557
    %613 = vmatprep.subr.mxu0 %v556
    %614 = vmatpush2.msra.mxu0 %v555
    %615 = vmatprep.subr.mxu0 %v554
    %616 = vmatpush2.msra.mxu0 %v553
    %617 = vmatprep.subr.mxu0 %v552
    %618 = vmatpush2.msra.mxu0 %v551
    %619 = vmatprep.subr.mxu0 %v550
    %620 = vmatpush2.msra.mxu0 %v549
    %621 = vmatprep.subr.mxu0 %v548
    %622 = vmatpush2.msra.mxu0 %v547
    %623 = vmatprep.subr.mxu0 %v546
    %624 = vmatpush2.msra.mxu0 %v545
    %625 = vmatprep.subr.mxu0 %v544
    %626 = vmatpush2.msra.mxu0 %v543
    %627 = vmatprep.subr.mxu0 %v542
    %628 = vmatpush2.msra.mxu0 %v541
    %629 = vmatprep.subr.mxu0 %v540
    %630 = vmatpush2.msra.mxu0 %v539
    %631 = vmatprep.subr.mxu0 %v538
    %632 = vmatpush2.msra.mxu0 %v537
    %633 = vmatprep.subr.mxu0 %v536
    %634 = vmatpush2.msra.mxu0 %v535
    %635 = vmatprep.subr.mxu0 %v534
    %636 = vmatpush2.msra.mxu0 %v533
    %637 = vmatprep.subr.mxu0 %v532
    %638 = vmatpush2.msra.mxu0 %v531
    %639 = vmatprep.mubr.f32.mxu0 %v498
    %640 = vmatmul.mubr.f32.gmra.mxu0 %v497
    %v641 = vpop.f32.mrf.mxu0
    %v642 = vadd.f32 %v568, %v641
    %v643 = vpop.f32.mrf.mxu0
    %v644 = vadd.f32 %v572, %v643
    %645 = vdwg.mxu0
    %v646 = vadd.f32 %v642, %v485
    %v647 = vadd.f32 %v644, %v487
    %v648 = vadd.f32 %v646, %v647
    %649 = vadd.xlane.f32.xlu0 %v648
    %v650 = vpop.xlane.xlu0 %649
    %v651 = vrcp.pop 256.0
    %v652 = vmul.f32 %v650, %v651
    %v653 = vsub.f32 %v646, %v652
    %v654 = vsub.f32 %v647, %v652
    %v655 = vmul.f32 %v653, %v653
    %v656 = vmul.f32 %v654, %v654
    %v657 = vadd.f32 %v655, %v656
    %658 = vadd.xlane.f32.xlu0 %v657
    %v659 = vpop.xlane.xlu0 %658
    %v660 = vmul.f32 %v659, %v651
    %v661 = vadd.f32 %v660, 1e-05
    %v662 = vrsqrt.pop %v661
    %v663 = vmul.f32 %v653, %v662
    %v664 = vmul.f32 %v654, %v662
    %v665 = vld [vmem:[%s5] sm:$0x3]
    %v667 = vlaneseq
    %v668 = vshrl.u32 %v667, 7
    %v669 = vsub.s32 0, %v668
    %v670 = vrot.slane %v665, %v669
    %v671 = vlaneseq
    %v672 = vshrl.u32 %v671, 7
    %v673 = vsub.s32 1, %v672
    %v674 = vrot.slane %v665, %v673
    %v677 = vmul.f32 %v663, %v670
    %v678 = vmul.f32 %v664, %v674
    %v679 = vld [vmem:[%s6] sm:$0x3]
    %v681 = vlaneseq
    %v682 = vshrl.u32 %v681, 7
    %v683 = vsub.s32 0, %v682
    %v684 = vrot.slane %v679, %v683
    %v685 = vlaneseq
    %v686 = vshrl.u32 %v685, 7
    %v687 = vsub.s32 1, %v686
    %v688 = vrot.slane %v679, %v687
    %v691 = vadd.f32 %v677, %v684
    %v692 = vadd.f32 %v678, %v688
    %693 = vst [vmem:[#allocation8] sm:$0xff] %v691
    %694 = vst [vmem:[#allocation8 + $0x8] sm:$0xff] %v692
    // Predicated region
    $region42: #{tpu_custom_call.1} parent=1 // pred_check
      _
    $region43: #{tpu_custom_call.1} parent=1 // pred_check_branch
      %696 = sbr.rel (0) target = $region45
    $region44: #{tpu_custom_call.1} parent=1 // pred_region
      %s698 = ssub.s32 256, 256
      %699 = vsyncadd [#allocation4], %s698
      %s701 = sshll.u32 [#allocation8], 4
      %s702 = int_to_ptr.vmem [resolvable:$true] %s701
      %704 = dma.vmem_to_hbm [thread:$0]  %s702, 256, %s7, [#allocation4]
    $region45: #{tpu_custom_call.1} parent=1 // pred_fallthru
      _
    // Predicated region
    $region46: #{tpu_custom_call.1} parent=1 // pred_check
      _
    $region47: #{tpu_custom_call.1} parent=1 // pred_check_branch
      %706 = sbr.rel (0) target = $region49
    $region48: #{tpu_custom_call.1} parent=1 // pred_region
      %707 = dma.done [#allocation4], 256
    $region49: #{tpu_custom_call.1} parent=1 // pred_fallthru
      _
    %708 = vsyncpa [#allocation3], 1
    %709 = vsyncpa [#allocation6], 1
    %710 = vsyncpa [#allocation4], 1

</llo_original>
